<compile_context>
chip_gen: v5e
topology: v5e:2x2
jax: 0.10.0
libtpu: 0.0.40
codegen_flags: <defaults>
</compile_context>

<pallas_src>
import functools

import numpy as np

import jax
import jax.numpy as jnp
from jax import lax
from jax.experimental import pallas as pl
from jax.experimental.pallas import tpu as pltpu


# ---------------------------------------------------------------------------
# Host-side constants: SOFT-grid quadrature weights (Kostelec & Rockmore)
# ---------------------------------------------------------------------------
@functools.lru_cache(maxsize=None)
def _s3_quadrature_weights(b: int) -> np.ndarray:
    """lie_learn.spaces.S3.quadrature_weights(b) for the SOFT grid.

    w_B(j) = (2/b) sin(pi(2j+1)/4b) * sum_{k<b} 1/(2k+1) sin((2j+1)(2k+1)pi/4b),
    normalized so the Haar measure of SO(3) integrates to 1.
    """
    # TODO(synk): normalization follows lie_learn's SOFT convention
    # (w /= 2*(2b)^2); other SOFT versions differ only by a constant factor.
    k = np.arange(b)
    w = np.array([
        (2.0 / b)
        * np.sin(np.pi * (2.0 * j + 1.0) / (4.0 * b))
        * np.sum((1.0 / (2 * k + 1))
                 * np.sin((2 * j + 1) * (2 * k + 1) * np.pi / (4.0 * b)))
        for j in range(2 * b)
    ])
    w /= 2.0 * (2 * b) ** 2
    return w.astype(np.float32)


@functools.lru_cache(maxsize=None)
def _flat_weights(two_beta: int, n_alpha: int) -> np.ndarray:
    """Broadcast the per-beta weights to the flattened (beta*alpha) lane layout."""
    w = _s3_quadrature_weights(two_beta // 2)            # (2b,)
    return np.repeat(w, n_alpha).reshape(1, two_beta * n_alpha)


def _round_up(x: int, m: int) -> int:
    return ((x + m - 1) // m) * m


# ---------------------------------------------------------------------------
# Pallas kernel
# ---------------------------------------------------------------------------
def _spherical_mse_kernel(o_ref, t_ref, w_ref, out_ref, acc_ref, *,
                          n_rows, blocks_per_p, tile_rows, inv_count):
    """One (row-tile, lane-tile) step of the weighted-squared-error reduction.

    o_ref, t_ref: (TN, TF)  flattened (beta*alpha) tiles of output / target
    w_ref:        (1, TF)   quadrature weights, broadcast over alpha
    out_ref:      (1, 128)  per-parallel-shard result block (lane 0 holds it)
    acc_ref:      (1, TF)   VMEM lane-vector accumulator (per core)
    """
    p = pl.program_id(0)
    i = pl.program_id(1)
    j = pl.program_id(2)
    last_i = pl.num_programs(1) - 1
    last_j = pl.num_programs(2) - 1

    @pl.when((i == 0) & (j == 0))
    def _init():
        acc_ref[...] = jnp.zeros_like(acc_ref)

    # Native-dtype loads; upcast in-register only.
    d = o_ref[...].astype(jnp.float32) - t_ref[...].astype(jnp.float32)
    wsq = d * d * w_ref[...]                                   # (TN, TF), VPU

    # Mask rows past the logical end: covers the ragged tail block and any
    # duplicated (clamped) blocks of the parallel shard. VPU work with slack.
    row_block = p * blocks_per_p + i
    row_id = row_block * tile_rows + lax.broadcasted_iota(jnp.int32, wsq.shape, 0)
    wsq = jnp.where(row_id < n_rows, wsq, 0.0)

    # Lane-wise partial sums: cross-sublane reduce only; the cross-lane reduce
    # and the scalar store stay out of the per-step dependency chain.
    acc_ref[...] += jnp.sum(wsq, axis=0, keepdims=True)

    @pl.when((i == last_i) & (j == last_j))
    def _finalize():
        total = jnp.sum(acc_ref[...]) * inv_count              # mean over rows
        lane = lax.broadcasted_iota(jnp.int32, out_ref.shape, 1)
        out_ref[...] = jnp.where(lane == 0, total, 0.0)


# ---------------------------------------------------------------------------
# Wrapper
# ---------------------------------------------------------------------------
def spherical_mse(output, target, *, interpret: bool = False):
    """Pallas equivalent of the PyTorch spherical_mse module's forward()."""
    assert output.shape == target.shape, "output/target shape mismatch"
    assert output.ndim >= 2, "need at least (beta, alpha) trailing dims"
    two_beta = output.shape[-2]
    n_alpha = output.shape[-1]
    assert two_beta % 2 == 0, "dim -2 must be 2*b (even)"

    lead = output.shape[:-2]
    n = int(np.prod(lead)) if lead else 1          # count the .mean() divides by
    feat = two_beta * n_alpha

    # Keep the narrow input dtype on the HBM side (bf16 stays bf16).
    dtype = jnp.promote_types(output.dtype, target.dtype)
    if not jnp.issubdtype(dtype, jnp.floating):
        dtype = jnp.float32
    o2 = jnp.reshape(output, (n, feat)).astype(dtype)
    t2 = jnp.reshape(target, (n, feat)).astype(dtype)
    w2 = jnp.asarray(_flat_weights(two_beta, n_alpha))          # (1, feat) f32

    itemsize = jnp.dtype(dtype).itemsize
    sub = max(8, 32 // itemsize)          # sublane packing: 8 f32, 16 bf16

    # ---- lane tiling: only when the flat dim is huge and 128-divisible -----
    lane_tile_cap = 8192
    if feat > lane_tile_cap and feat % 128 == 0:
        m = feat // 128
        div = 1
        for cand in range(min(m, lane_tile_cap // 128), 0, -1):
            if m % cand == 0:
                div = cand
                break
        tf = 128 * div
    else:
        tf = feat
    n_lane_tiles = feat // tf

    # ---- row tiling: ~4 MiB per input block, 2 inputs x 2 buffers in VMEM --
    vmem_budget = 24 * 1024 * 1024        # headroom under the 32 MiB scoped cap
    block_bytes = min(4 * 1024 * 1024, vmem_budget // 4)
    tn = max(sub, (block_bytes // max(1, tf * itemsize)) // sub * sub)
    tn = min(tn, _round_up(n, sub))       # never taller than the row count
    n_row_blocks = (n + tn - 1) // tn

    # ---- megacore sharding over row blocks (2x on v7x, neutral elsewhere) --
    n_par = 2 if n_row_blocks >= 2 else 1
    blocks_per_p = (n_row_blocks + n_par - 1) // n_par

    if n_par * blocks_per_p == n_row_blocks:
        def _row_map(p_, i_, j_):
            return (p_ * blocks_per_p + i_, j_)
    else:
        def _row_map(p_, i_, j_):
            # clamp so the DMA never walks past the array; masked in-kernel
            return (jnp.minimum(p_ * blocks_per_p + i_, n_row_blocks - 1), j_)

    kernel = functools.partial(
        _spherical_mse_kernel,
        n_rows=n, blocks_per_p=blocks_per_p, tile_rows=tn,
        inv_count=1.0 / float(n))

    out = pl.pallas_call(
        kernel,
        out_shape=jax.ShapeDtypeStruct((1, 128 * n_par), jnp.float32),
        grid_spec=pltpu.PrefetchScalarGridSpec(
            num_scalar_prefetch=0,
            grid=(n_par, blocks_per_p, n_lane_tiles),
            in_specs=[
                pl.BlockSpec((tn, tf), _row_map),                     # output
                pl.BlockSpec((tn, tf), _row_map),                     # target
                pl.BlockSpec((1, tf), lambda p_, i_, j_: (0, j_)),    # weights
            ],
            out_specs=pl.BlockSpec((1, 128), lambda p_, i_, j_: (0, p_)),
            scratch_shapes=[pltpu.VMEM((1, tf), jnp.float32)],
        ),
        compiler_params=pltpu.CompilerParams(
            dimension_semantics=("parallel", "arbitrary", "arbitrary"),
            vmem_limit_bytes=32 * 1024 * 1024,
        ),
        interpret=interpret,
    )(o2, t2, w2)

    # Per-shard partial means sit in lane 0 of each 128-lane slot; the rest of
    # the output block is exact zeros, so a plain sum recovers the loss.
    return jnp.sum(out)


# ---------------------------------------------------------------------------
# Pure-JAX reference (mirrors the PyTorch module exactly)
# ---------------------------------------------------------------------------
def spherical_mse_ref(output, target):
    two_beta = output.shape[-2]
    w = jnp.asarray(_s3_quadrature_weights(two_beta // 2))     # (2b,)
    sq = (output - target) ** 2
    s = jnp.sum(sq, axis=-1)                                   # sum over alpha
    integ = jnp.sum(s * w, axis=-1)                            # quadrature over beta
    return jnp.mean(integ)


if __name__ == "__main__":
    B, C, RES = 2, 4, 16      # bandwidth b = 8  ->  2b = 16 grid points
    key = jax.random.PRNGKey(0)
    k1, k2 = jax.random.split(key)
    output = jax.random.normal(k1, (B, C, RES, RES), dtype=jnp.float32)
    target = jax.random.normal(k2, (B, C, RES, RES), dtype=jnp.float32)

    loss = jax.block_until_ready(jax.jit(spherical_mse)(output, target))
    ref = spherical_mse_ref(output, target)

    assert loss.shape == ()
    assert bool(jnp.isfinite(loss))
    assert bool(jnp.allclose(loss, ref, rtol=1e-5, atol=1e-6)), (float(loss), float(ref))

    print("KERNEL_OK")
</pallas_src>

<mosaic_0001>
module attributes {stable_mosaic.version = 11 : i64} {
  func.func @_spherical_mse_kernel(%arg0: i32, %arg1: i32, %arg2: i32, %arg3: memref<8x256xf32, #tpu.memory_space<vmem>>, %arg4: memref<8x256xf32, #tpu.memory_space<vmem>>, %arg5: memref<1x256xf32, #tpu.memory_space<vmem>>, %arg6: memref<1x128xf32, #tpu.memory_space<vmem>>, %arg7: memref<1x256xf32, #tpu.memory_space<vmem>>) attributes {dimension_semantics = [#tpu.dimension_semantics<parallel>, #tpu.dimension_semantics<arbitrary>, #tpu.dimension_semantics<arbitrary>], iteration_bounds = array<i64: 1, 1, 1>, scalar_prefetch = 0 : i64, scratch_operands = 1 : i64, tpu.core_type = #tpu.core_type<tc>, window_params = [{transform_indices = @transform_0, window_bounds = array<i64: 8, 256>}, {transform_indices = @transform_1, window_bounds = array<i64: 8, 256>}, {transform_indices = @transform_2, window_bounds = array<i64: 1, 256>}, {transform_indices = @transform_3, window_bounds = array<i64: 1, 128>}]} {
    %c0_i32 = arith.constant 0 : i32
    %0 = arith.cmpi eq, %arg1, %c0_i32 : i32
    %c0_i32_0 = arith.constant 0 : i32
    %1 = arith.cmpi eq, %arg2, %c0_i32_0 : i32
    %2 = arith.andi %0, %1 : i1
    %3 = arith.extui %2 : i1 to i32
    %c0_i32_1 = arith.constant 0 : i32
    %4 = arith.cmpi ne, %3, %c0_i32_1 : i32
    scf.if %4 {
      %cst_16 = arith.constant 0.000000e+00 : f32
      %32 = vector.broadcast %cst_16 : f32 to vector<1x256xf32>
      %c0_17 = arith.constant 0 : index
      %c0_18 = arith.constant 0 : index
      %33 = vector.load %arg7[%c0_17, %c0_18] : memref<1x256xf32, #tpu.memory_space<vmem>>, vector<1x256xf32>
      tpu.vector_store %arg7[%c0_17, %c0_18], %32 {strides = array<i32>} : memref<1x256xf32, #tpu.memory_space<vmem>>, vector<1x256xf32>,
    } else {
    }
    %c0 = arith.constant 0 : index
    %c0_2 = arith.constant 0 : index
    %5 = vector.load %arg3[%c0, %c0_2] : memref<8x256xf32, #tpu.memory_space<vmem>>, vector<8x256xf32>
    %c0_3 = arith.constant 0 : index
    %c0_4 = arith.constant 0 : index
    %6 = vector.load %arg4[%c0_3, %c0_4] : memref<8x256xf32, #tpu.memory_space<vmem>>, vector<8x256xf32>
    %7 = arith.subf %5, %6 : vector<8x256xf32>
    %8 = arith.mulf %7, %7 : vector<8x256xf32>
    %c0_5 = arith.constant 0 : index
    %c0_6 = arith.constant 0 : index
    %9 = vector.load %arg5[%c0_5, %c0_6] : memref<1x256xf32, #tpu.memory_space<vmem>>, vector<1x256xf32>
    %10 = vector.broadcast %9 : vector<1x256xf32> to vector<8x256xf32>
    %11 = arith.mulf %8, %10 : vector<8x256xf32>
    %c1_i32 = arith.constant 1 : i32
    %12 = arith.muli %arg0, %c1_i32 : i32
    %13 = arith.addi %12, %arg1 : i32
    %c8_i32 = arith.constant 8 : i32
    %14 = arith.muli %13, %c8_i32 : i32
    %15 = tpu.iota {dimensions = array<i32: 0>} : vector<8x256xi32>
    %16 = vector.broadcast %14 : i32 to vector<8x256xi32>
    %17 = arith.addi %16, %15 : vector<8x256xi32>
    %c8_i32_7 = arith.constant 8 : i32
    %18 = vector.broadcast %c8_i32_7 : i32 to vector<8x256xi32>
    %19 = arith.cmpi slt, %17, %18 : vector<8x256xi32>
    %cst = arith.constant 0.000000e+00 : f32
    %20 = vector.broadcast %cst : f32 to vector<8x256xf32>
    %21 = arith.select %19, %11, %20 : vector<8x256xi1>, vector<8x256xf32>
    %c0_8 = arith.constant 0 : index
    %c0_9 = arith.constant 0 : index
    %22 = vector.load %arg7[%c0_8, %c0_9] : memref<1x256xf32, #tpu.memory_space<vmem>>, vector<1x256xf32>
    %cst_10 = arith.constant dense<0.000000e+00> : vector<256xf32>
    %23 = vector.multi_reduction <add>, %21, %cst_10 [0] : vector<8x256xf32> to vector<256xf32>
    %24 = vector.shape_cast %23 : vector<256xf32> to vector<1x256xf32>
    %25 = arith.addf %22, %24 : vector<1x256xf32>
    %c0_11 = arith.constant 0 : index
    %c0_12 = arith.constant 0 : index
    %26 = vector.load %arg7[%c0_11, %c0_12] : memref<1x256xf32, #tpu.memory_space<vmem>>, vector<1x256xf32>
    tpu.vector_store %arg7[%c0_11, %c0_12], %25 {strides = array<i32>} : memref<1x256xf32, #tpu.memory_space<vmem>>, vector<1x256xf32>,
    %c0_i32_13 = arith.constant 0 : i32
    %27 = arith.cmpi eq, %arg1, %c0_i32_13 : i32
    %c0_i32_14 = arith.constant 0 : i32
    %28 = arith.cmpi eq, %arg2, %c0_i32_14 : i32
    %29 = arith.andi %27, %28 : i1
    %30 = arith.extui %29 : i1 to i32
    %c0_i32_15 = arith.constant 0 : i32
    %31 = arith.cmpi ne, %30, %c0_i32_15 : i32
    scf.if %31 {
      %c0_16 = arith.constant 0 : index
      %c0_17 = arith.constant 0 : index
      %32 = vector.load %arg7[%c0_16, %c0_17] : memref<1x256xf32, #tpu.memory_space<vmem>>, vector<1x256xf32>
      %33 = vector.shape_cast %32 : vector<1x256xf32> to vector<1x1x256xf32>
      %cst_18 = arith.constant dense<0.000000e+00> : vector<1xf32>
      %34 = vector.multi_reduction <add>, %33, %cst_18 [1, 2] : vector<1x1x256xf32> to vector<1xf32>
      %35 = vector.shape_cast %34 : vector<1xf32> to vector<1x1x1xf32>
      %36 = vector.extract %35[0, 0, 0] : f32 from vector<1x1x1xf32>
      %cst_19 = arith.constant 1.250000e-01 : f32
      %37 = arith.mulf %36, %cst_19 : f32
      %38 = tpu.iota {dimensions = array<i32: 1>} : vector<1x128xi32>
      %c0_i32_20 = arith.constant 0 : i32
      %39 = vector.broadcast %c0_i32_20 : i32 to vector<1x128xi32>
      %40 = arith.cmpi eq, %38, %39 : vector<1x128xi32>
      %cst_21 = arith.constant 0.000000e+00 : f32
      %41 = vector.broadcast %37 : f32 to vector<1x128xf32>
      %42 = vector.broadcast %cst_21 : f32 to vector<1x128xf32>
      %43 = arith.select %40, %41, %42 : vector<1x128xi1>, vector<1x128xf32>
      %c0_22 = arith.constant 0 : index
      %c0_23 = arith.constant 0 : index
      %44 = vector.load %arg6[%c0_22, %c0_23] : memref<1x128xf32, #tpu.memory_space<vmem>>, vector<1x128xf32>
      tpu.vector_store %arg6[%c0_22, %c0_23], %43 {strides = array<i32>} : memref<1x128xf32, #tpu.memory_space<vmem>>, vector<1x128xf32>,
    } else {
    }
    return
  }
  func.func @transform_0(%arg0: i32, %arg1: i32, %arg2: i32) -> (i32, i32) {
    %c1_i32 = arith.constant 1 : i32
    %0 = arith.muli %arg0, %c1_i32 : i32
    %1 = arith.addi %0, %arg1 : i32
    %c0_i32 = arith.constant 0 : i32
    return %1, %arg2 : i32, i32
  }
  func.func @transform_1(%arg0: i32, %arg1: i32, %arg2: i32) -> (i32, i32) {
    %c1_i32 = arith.constant 1 : i32
    %0 = arith.muli %arg0, %c1_i32 : i32
    %1 = arith.addi %0, %arg1 : i32
    %c0_i32 = arith.constant 0 : i32
    return %1, %arg2 : i32, i32
  }
  func.func @transform_2(%arg0: i32, %arg1: i32, %arg2: i32) -> (i32, i32) {
    %c0_i32 = arith.constant 0 : i32
    %c0_i32_0 = arith.constant 0 : i32
    return %c0_i32, %arg2 : i32, i32
  }
  func.func @transform_3(%arg0: i32, %arg1: i32, %arg2: i32) -> (i32, i32) {
    %c0_i32 = arith.constant 0 : i32
    %c0_i32_0 = arith.constant 0 : i32
    return %c0_i32, %arg0 : i32, i32
  }
}

</mosaic_0001>

<llo_original>
// kernel: spherical_mse.1
$region0: #{spherical_mse.1}
  #allocation0 [shape = 'u32[]', space=smem, size = 0x4, offset = 0x4, fixed_abs, tag = 'smem constant byte address 0x4 - core index']
  #allocation1 [shape = 'u32[72,128]{1,0:T(1,128)}', space=vmem, size = 0x9000, scoped, tag = 'internal scratch']
  #allocation2 [shape = 'f32[1,256]{1,0:T(1,128)}', space=vmem, size = 0x400, scoped, tag = 'scratch operand']
  %s0 = inlined_call_operand.vmem [shape: f32[8,256], index: 0, kind: input, shape index: {}]
  %s1 = inlined_call_operand.vmem [shape: f32[8,256], index: 1, kind: input, shape index: {}]
  %s2 = inlined_call_operand.vmem [shape: f32[1,256], index: 2, kind: input, shape index: {}]
  %s3 = inlined_call_operand.vmem [shape: f32[1,128], index: 3, kind: output, shape index: {}]
  %s4 = sld [smem:[#allocation0]]
  $region30: #{spherical_mse.1} parent=0
    _
  %s6 = ssub.s32 1, %s4
  %s7 = scalar_select 0, %s6, %s4
  // Predicated region
  $region2: #{spherical_mse.1} parent=0 // pred_check
    _
  $region3: #{spherical_mse.1} parent=0 // pred_check_branch
    %9 = sbr.rel (0) target = $region5
  $region4: #{spherical_mse.1} parent=0 // pred_region
    %s10 = sadd.s32 0, 0
    %p11 = scmp.lt.s32.totalorder %s10, 0
    %s12 = scalar_select %p11, %s10, 0
    %s13 = smul.addr %s12, 2
    %s14 = smul.addr %s13, 8
    %s15 = scalar_lea.vmem %s0, %s14
    %s16 = sadd.s32 0, 0
  $region5: #{spherical_mse.1} parent=0 // pred_fallthru
    _
  // Predicated region
  $region6: #{spherical_mse.1} parent=0 // pred_check
    _
  $region7: #{spherical_mse.1} parent=0 // pred_check_branch
    %18 = sbr.rel (0) target = $region9
  $region8: #{spherical_mse.1} parent=0 // pred_region
    %s19 = sadd.s32 0, 0
    %p20 = scmp.lt.s32.totalorder %s19, 0
    %s21 = scalar_select %p20, %s19, 0
    %s22 = smul.addr %s21, 2
    %s23 = smul.addr %s22, 8
    %s24 = scalar_lea.vmem %s1, %s23
    %s25 = sadd.s32 0, 0
  $region9: #{spherical_mse.1} parent=0 // pred_fallthru
    _
  // Predicated region
  $region10: #{spherical_mse.1} parent=0 // pred_check
    _
  $region11: #{spherical_mse.1} parent=0 // pred_check_branch
    %27 = sbr.rel (0) target = $region13
  $region12: #{spherical_mse.1} parent=0 // pred_region
    _
  $region13: #{spherical_mse.1} parent=0 // pred_fallthru
    _
  %s28 = sadd.s32 0, 0
  %p29 = scmp.lt.s32.totalorder %s28, 0
  %s30 = scalar_select %p29, %s28, 0
  %s31 = smul.addr %s30, 2
  %s32 = smul.addr %s31, 8
  %s33 = scalar_lea.vmem %s0, %s32
  %s34 = sadd.s32 0, 0
  %p35 = scmp.lt.s32.totalorder %s34, 0
  %s36 = scalar_select %p35, %s34, 0
  %s37 = smul.addr %s36, 2
  %s38 = smul.addr %s37, 8
  %s39 = scalar_lea.vmem %s1, %s38
  %s40 = sadd.s32 0, 0
  %p41 = scmp.lt.s32.totalorder %s40, 0
  %s42 = scalar_select %p41, %s40, 0
  %s43 = smul.addr %s42, 2
  %s44 = smul.addr %s43, 8
  %s45 = scalar_lea.vmem %s0, %s44
  %s46 = sadd.s32 0, 0
  %s47 = sadd.s32 0, 0
  %p48 = scmp.lt.s32.totalorder %s47, 0
  %s49 = scalar_select %p48, %s47, 0
  %s50 = smul.addr %s49, 2
  %s51 = smul.addr %s50, 8
  %s52 = scalar_lea.vmem %s1, %s51
  %s53 = sadd.s32 0, 0
  %p54 = scmp.eq.s32.totalorder 0, 0
  %p55 = scmp.eq.s32.totalorder 0, 0
  %p56 = pnand %p54, %p55
  %p57 = pneg %p56
  // Predicated region
  $region14: #{spherical_mse.1} parent=0 // pred_check
    _
  $region15: #{spherical_mse.1} parent=0 // pred_check_branch
    %59 = sbr.rel (%p56) target = $region17
  $region16: #{spherical_mse.1} parent=0 // pred_region
    %v60 = vlaneseq
    %vm61 = vcmp.ge.s32.totalorder %v60, 0
    %vm62 = vcmp.lt.s32.totalorder %v60, 256
    %vm63 = vmand %vm61, %vm62
    %64 = vst.msk [vmem:[#allocation2] sm:$0x3] %vm63, 0.0
  $region17: #{spherical_mse.1} parent=0 // pred_fallthru
    _
  %v65 = vld [vmem:[%s45] sm:$0xff]
  %v66 = vld [vmem:[%s45 + $0x8] sm:$0xff]
  %v67 = vld [vmem:[%s52] sm:$0xff]
  %v68 = vld [vmem:[%s52 + $0x8] sm:$0xff]
  %v69 = vsub.f32 %v65, %v67
  %v70 = vsub.f32 %v66, %v68
  %v71 = vmul.f32 %v69, %v69
  %v72 = vmul.f32 %v70, %v70
  %v73 = vld [vmem:[%s2] sm:$0x3]
  %v75 = vperm.slane %v73, 0
  %v76 = vperm.slane %v73, 1
  %v79 = vmul.f32 %v71, %v75
  %v80 = vmul.f32 %v72, %v76
  %s81 = sadd.s32 0, 0
  %s82 = smul.u32 %s81, 8
  %v83 = vlaneseq
  %v84 = vshrl.u32 %v83, 7
  %v85 = vstv %s82
  %v86 = vadd.s32 %v85, %v84
  %vm87 = vcmp.lt.s32.totalorder %v86, 8
  %v88 = vsel %vm87, %v79, 0.0
  %v89 = vsel %vm87, %v80, 0.0
  %v90 = vld [vmem:[#allocation2] sm:$0x3]
  %v91 = vrot.slane %v88, 4
  %v92 = vadd.f32 %v88, %v91
  %v93 = vrot.slane %v92, 2
  %v94 = vadd.f32 %v92, %v93
  %v95 = vrot.slane %v94, 1
  %v96 = vadd.f32 %v94, %v95
  %v97 = vrot.slane %v89, 4
  %v98 = vadd.f32 %v89, %v97
  %v99 = vrot.slane %v98, 2
  %v100 = vadd.f32 %v98, %v99
  %v101 = vrot.slane %v100, 1
  %v102 = vadd.f32 %v100, %v101
  %v105 = vrot.slane %v102, 7
  %vm106 = vcmask 1040384
  %v107 = vsel %vm106, %v96, %v105
  %v109 = vadd.f32 %v90, %v107
  %v110 = vlaneseq
  %vm111 = vcmp.ge.s32.totalorder %v110, 0
  %vm112 = vcmp.lt.s32.totalorder %v110, 256
  %vm113 = vmand %vm111, %vm112
  %114 = vst.msk [vmem:[#allocation2] sm:$0x3] %vm113, %v109
  // Predicated region
  $region18: #{spherical_mse.1} parent=0 // pred_check
    _
  $region19: #{spherical_mse.1} parent=0 // pred_check_branch
    %116 = sbr.rel (%p56) target = $region21
  $region20: #{spherical_mse.1} parent=0 // pred_region
    %v117 = vld [vmem:[#allocation2] sm:$0x3]
    %v119 = vperm.slane %v117, 0
    %v120 = vperm.slane %v117, 1
    %v123 = vsel %vm106, %v119, 0.0
    %v124 = vsel %vm106, %v120, 0.0
    %v125 = vadd.f32 %v123, %v124
    %126 = vadd.xlane.f32.xlu0 %v125
    %v127 = vpop.xlane.xlu0 %126
    %v128 = vrot.slane %v127, 4
    %v129 = vadd.f32 %v127, %v128
    %v130 = vrot.slane %v129, 2
    %v131 = vadd.f32 %v129, %v130
    %v132 = vrot.slane %v131, 1
    %v133 = vadd.f32 %v131, %v132
    %s134 = vtos %v133
    %s135 = smul.f32 %s134, 0.125
    %v136 = vlaneseq
    %v137 = vand.u32 %v136, 127
    %vm138 = vcmp.eq.s32.totalorder %v137, 0
    %v139 = vstv %s135
    %v140 = vsel %vm138, %v139, 0.0
    %141 = vst [vmem:[%s3] sm:$0x1] %v140
  $region21: #{spherical_mse.1} parent=0 // pred_fallthru
    _
  // Predicated region
  $region22: #{spherical_mse.1} parent=0 // pred_check
    _
  $region23: #{spherical_mse.1} parent=0 // pred_check_branch
    %143 = sbr.rel (0) target = $region25
  $region24: #{spherical_mse.1} parent=0 // pred_region
    _
  $region25: #{spherical_mse.1} parent=0 // pred_fallthru
    _
  // Predicated region
  $region26: #{spherical_mse.1} parent=0 // pred_check
    _
  $region27: #{spherical_mse.1} parent=0 // pred_check_branch
    %145 = sbr.rel (0) target = $region29
  $region28: #{spherical_mse.1} parent=0 // pred_region
    _
  $region29: #{spherical_mse.1} parent=0 // pred_fallthru
    _

</llo_original>
